<compile_context>
chip_gen: v7x
topology: tpu7x:2x2x1
jax: 0.10.0
libtpu: 0.0.40
codegen_flags: <defaults>
</compile_context>

<pallas_src>
import functools

import jax
import jax.numpy as jnp
import numpy as np
from jax import lax
from jax.experimental import pallas as pl
from jax.experimental.pallas import tpu as pltpu


def _lmi_hinf_kernel(consts_ref, p_ref, gamma_ref, out_ref, *, nx, nu):
    """Writes -M of shape (nx+nu, nx+nu).

    consts_ref holds the packed, static operands [A; C^T C; B^T] of shape
    (2*nx + nu, nx). p_ref holds the RAW P; symmetrization is done in-kernel.
    """
    gamma = gamma_ref[0]
    inv_gamma = 1.0 / gamma

    A = consts_ref[:nx, :]                      # (nx, nx)
    CtC = consts_ref[nx:2 * nx, :]              # (nx, nx)  = C^T C (precomputed)
    Bt = consts_ref[2 * nx:2 * nx + nu, :]      # (nu, nx)  = B^T

    # symetrizeP_() folded into the kernel: one single-vreg transpose.
    P_raw = p_ref[...]
    P = 0.5 * (P_raw + P_raw.T)
    negP = -P

    # lhs^T @ rhs via a (0,0) contraction — no explicit transpose on the feed.
    dn_t = (((0,), (0,)), ((), ()))

    # M11 = A^T P + P A + (1/gamma) C^T C.  With P symmetric, P A = (A^T P)^T,
    # so one matmul + one single-vreg transpose covers both P terms.
    S = lax.dot_general(A, P, dn_t, preferred_element_type=jnp.float32)   # A^T P
    neg_m11 = -(S + S.T) - inv_gamma * CtC                                # (nx, nx)

    # -M21 = B^T (-P)  (one matmul);   -M12 = (-M21)^T   (P symmetric).
    neg_m21 = jnp.dot(Bt, negP, preferred_element_type=jnp.float32)       # (nu, nx)
    neg_m12 = neg_m21.T                                                   # (nx, nu)

    # -M22 = gamma * I_nu
    row = lax.broadcasted_iota(jnp.int32, (nu, nu), 0)
    col = lax.broadcasted_iota(jnp.int32, (nu, nu), 1)
    neg_m22 = jnp.where(row == col, gamma, jnp.float32(0.0))              # (nu, nu)

    # Two stores, both sublane-tile-aligned and at lane offset 0. The output's
    # last dim (nx+nu=12 < 128) makes every store masked regardless, so no
    # full-matrix in-register assembly is performed.
    out_ref[:nx, :] = jnp.concatenate((neg_m11, neg_m12), axis=1)         # (nx, nx+nu)
    out_ref[nx:, :] = jnp.concatenate((neg_m21, neg_m22), axis=1)         # (nu, nx+nu)


def prepare_constants(A, B, C):
    """Module-__init__-time work: precompute C^T C (A, B, C are static) and
    pack all static operands into ONE array -> one DMA descriptor per call."""
    A = jnp.asarray(A, jnp.float32)
    B = jnp.asarray(B, jnp.float32)
    C = jnp.asarray(C, jnp.float32)
    CtC = C.T @ C                                   # (nx, nx), computed once
    return jnp.concatenate((A, CtC, B.T), axis=0)   # (2*nx + nu, nx)


@jax.jit
def lmi_hinf_forward(consts, P, gamma):
    """Pallas-backed, jittable equivalent of LMI_HInf.forward(). Returns -M."""
    nx = P.shape[0]
    nu = consts.shape[0] - 2 * nx

    gamma_arr = jnp.reshape(jnp.asarray(gamma, dtype=jnp.float32), (1,))
    kernel = functools.partial(_lmi_hinf_kernel, nx=nx, nu=nu)

    return pl.pallas_call(
        kernel,
        out_shape=jax.ShapeDtypeStruct((nx + nu, nx + nu), jnp.float32),
        in_specs=[
            pl.BlockSpec(memory_space=pltpu.VMEM),  # packed [A; C^T C; B^T]
            pl.BlockSpec(memory_space=pltpu.VMEM),  # P (raw; symmetrized in-kernel)
            pl.BlockSpec(memory_space=pltpu.SMEM),  # gamma (scalar)
        ],
        out_specs=pl.BlockSpec(memory_space=pltpu.VMEM),
    )(consts, P, gamma_arr)


def check_p_is_spd(P):
    """One-time SPD validation (torch.linalg.eig equivalent), kept OUT of the
    jittable forward path to avoid a blocking device->host sync per call."""
    # TODO(synk): eigendecomposition has no Pallas equivalent; validated host-side.
    P_np = np.asarray(P)
    eig_val = np.linalg.eigvalsh(0.5 * (P_np + P_np.T))
    if not np.all(eig_val > 0):
        raise AssertionError("P is not SDP")


def _reference(A, B, C, P, gamma):
    """Pure-JAX reference of the PyTorch forward for the correctness check."""
    P = 0.5 * (P + P.T)
    nu = B.shape[1]
    M11 = A.T @ P + P @ A + (1.0 / gamma) * (C.T @ C)
    M12 = P @ B
    M22 = -gamma * jnp.eye(nu, dtype=jnp.float32)
    M = jnp.concatenate(
        (jnp.concatenate((M11, M12), axis=1),
         jnp.concatenate((M12.T, M22), axis=1)),
        axis=0,
    )
    return -M


if __name__ == "__main__":
    # Small, deterministic problem sizes consistent with the module:
    nx, nu, ny = 8, 4, 4

    key = jax.random.PRNGKey(0)
    k_a, k_b, k_c, k_p = jax.random.split(key, 4)

    A = jax.random.normal(k_a, (nx, nx), dtype=jnp.float32)
    B = jax.random.normal(k_b, (nx, nu), dtype=jnp.float32)
    C = jax.random.normal(k_c, (ny, nx), dtype=jnp.float32)

    # Deterministic synthetic SPD P (stands in for the MOSEK-solved init), gamma > 0.
    Q = jax.random.normal(k_p, (nx, nx), dtype=jnp.float32)
    P = Q @ Q.T + nx * jnp.eye(nx, dtype=jnp.float32)
    gamma = jnp.float32(2.0)

    # SPD assertion (module semantics), done once outside the hot forward path.
    check_p_is_spd(P)

    # __init__-time packing of the static operands (A, B, C fixed in the module).
    consts = prepare_constants(A, B, C)

    out = lmi_hinf_forward(consts, P, gamma)
    out = jax.block_until_ready(out)

    ref = _reference(A, B, C, P, gamma)
    np.testing.assert_allclose(np.asarray(out), np.asarray(ref), rtol=1e-5, atol=1e-5)

    print("KERNEL_OK")
</pallas_src>

<mosaic_0001>
module attributes {stable_mosaic.version = 11 : i64} {
  func.func @_lmi_hinf_kernel(%arg0: memref<20x8xf32, #tpu.memory_space<vmem>>, %arg1: memref<8x8xf32, #tpu.memory_space<vmem>>, %arg2: memref<1xf32, #tpu.memory_space<smem>>, %arg3: memref<12x12xf32, #tpu.memory_space<vmem>>) attributes {dimension_semantics = [], scalar_prefetch = 0 : i64, scratch_operands = 0 : i64, tpu.core_type = #tpu.core_type<tc>} {
    %c0 = arith.constant 0 : index
    %0 = memref.load %arg2[%c0] : memref<1xf32, #tpu.memory_space<smem>>
    %cst = arith.constant 1.000000e+00 : f32
    %1 = arith.divf %cst, %0 : f32
    %c0_0 = arith.constant 0 : index
    %c0_1 = arith.constant 0 : index
    %2 = vector.load %arg0[%c0_0, %c0_1] : memref<20x8xf32, #tpu.memory_space<vmem>>, vector<8x8xf32>
    %c8 = arith.constant 8 : index
    %c0_2 = arith.constant 0 : index
    %3 = vector.load %arg0[%c8, %c0_2] : memref<20x8xf32, #tpu.memory_space<vmem>>, vector<8x8xf32>
    %c16 = arith.constant 16 : index
    %c0_3 = arith.constant 0 : index
    %4 = vector.load %arg0[%c16, %c0_3] : memref<20x8xf32, #tpu.memory_space<vmem>>, vector<4x8xf32>
    %c0_4 = arith.constant 0 : index
    %c0_5 = arith.constant 0 : index
    %5 = vector.load %arg1[%c0_4, %c0_5] : memref<8x8xf32, #tpu.memory_space<vmem>>, vector<8x8xf32>
    %6 = tpu.transpose %5, [1, 0] : vector<8x8xf32> -> vector<8x8xf32>
    %7 = arith.addf %5, %6 : vector<8x8xf32>
    %cst_6 = arith.constant 5.000000e-01 : f32
    %8 = vector.broadcast %cst_6 : f32 to vector<8x8xf32>
    %9 = arith.mulf %8, %7 : vector<8x8xf32>
    %cst_7 = arith.constant 0.000000e+00 : f32
    %10 = vector.broadcast %cst_7 : f32 to vector<8x8xf32>
    %11 = arith.subf %10, %9 : vector<8x8xf32>
    %cst_8 = arith.constant dense<0.000000e+00> : vector<8x8xf32>
    %12 = tpu.matmul %2, %9, %cst_8 {dimension_numbers = #tpu.dot_dimension_numbers<[0], [0], [1], [1], [0, 1, 1, 1], [], []>} : vector<8x8xf32>, vector<8x8xf32>, vector<8x8xf32> -> vector<8x8xf32>
    %13 = tpu.transpose %12, [1, 0] : vector<8x8xf32> -> vector<8x8xf32>
    %14 = arith.addf %12, %13 : vector<8x8xf32>
    %cst_9 = arith.constant 0.000000e+00 : f32
    %15 = vector.broadcast %cst_9 : f32 to vector<8x8xf32>
    %16 = arith.subf %15, %14 : vector<8x8xf32>
    %17 = vector.broadcast %1 : f32 to vector<8x8xf32>
    %18 = arith.mulf %17, %3 : vector<8x8xf32>
    %19 = arith.subf %16, %18 : vector<8x8xf32>
    %cst_10 = arith.constant dense<0.000000e+00> : vector<4x8xf32>
    %20 = tpu.matmul %4, %11, %cst_10 {dimension_numbers = #tpu.dot_dimension_numbers<[1], [0], [0], [1], [0, 0, 1, 1], [], []>} : vector<4x8xf32>, vector<8x8xf32>, vector<4x8xf32> -> vector<4x8xf32>
    %21 = tpu.transpose %20, [1, 0] : vector<4x8xf32> -> vector<8x4xf32>
    %22 = tpu.iota {dimensions = array<i32: 0>} : vector<4x4xi32>
    %23 = tpu.iota {dimensions = array<i32: 1>} : vector<4x4xi32>
    %24 = arith.cmpi eq, %22, %23 : vector<4x4xi32>
    %cst_11 = arith.constant 0.000000e+00 : f32
    %25 = vector.broadcast %0 : f32 to vector<4x4xf32>
    %26 = vector.broadcast %cst_11 : f32 to vector<4x4xf32>
    %27 = arith.select %24, %25, %26 : vector<4x4xi1>, vector<4x4xf32>
    %28 = tpu.concatenate %19, %21 in 1 : vector<8x8xf32>, vector<8x4xf32> -> vector<8x12xf32>
    %c0_12 = arith.constant 0 : index
    %c0_13 = arith.constant 0 : index
    %29 = vector.load %arg3[%c0_12, %c0_13] : memref<12x12xf32, #tpu.memory_space<vmem>>, vector<8x12xf32>
    tpu.vector_store %arg3[%c0_12, %c0_13], %28 {strides = array<i32>} : memref<12x12xf32, #tpu.memory_space<vmem>>, vector<8x12xf32>,
    %30 = tpu.concatenate %20, %27 in 1 : vector<4x8xf32>, vector<4x4xf32> -> vector<4x12xf32>
    %c8_14 = arith.constant 8 : index
    %c0_15 = arith.constant 0 : index
    %31 = vector.load %arg3[%c8_14, %c0_15] : memref<12x12xf32, #tpu.memory_space<vmem>>, vector<4x12xf32>
    tpu.vector_store %arg3[%c8_14, %c0_15], %30 {strides = array<i32>} : memref<12x12xf32, #tpu.memory_space<vmem>>, vector<4x12xf32>,
    return
  }
}

</mosaic_0001>

<llo_original>
// kernel: lmi_hinf_forward.1
$region0: #{lmi_hinf_forward.1}
  #allocation0 [shape = 'u32[]', space=smem, size = 0x4, offset = 0x4, fixed_abs, tag = 'smem constant byte address 0x4 - core index']
  #allocation1 [shape = 'u32[144,128]{1,0:T(1,128)}', space=vmem, size = 0x12000, scoped, tag = 'internal scratch']
  #allocation2 [shape = 'f32[1]{0:T(128)S(6)}', space=smem, size = 0x200, scoped, tag = 'scoped memory for lmi_hinf_forward.1']
  %s0 = inlined_call_operand.vmem [shape: f32[20,8], index: 0, kind: input, shape index: {}]
  %s1 = inlined_call_operand.vmem [shape: f32[8,8], index: 1, kind: input, shape index: {}]
  %s2 = inlined_call_operand.<no memory space> [shape: f32[1], index: 2, kind: input, shape index: {}]
  %s3 = inlined_call_operand.hbm [shape: f32[12,12], index: 3, kind: output, shape index: {}]
  %s4 = sld [smem:[#allocation0]]
  $region22: #{lmi_hinf_forward.1} parent=0
    _
  %s6 = ssub.s32 1, %s4
  %s7 = scalar_select 0, %s6, %s4
  %8 = sst [smem:[#allocation2]] %s2
  $region1: #{lmi_hinf_forward.1} parent=0
    #allocation3 [shape = 'u8[8192]{0}', space=vmem, size = 0x2000, scoped, tag = 'output window, operand 0, single buffered']
    #allocation4 [shape = 's32[1]{0}', space=sflag, size = 0x4, scoped, tag = 'scoped memory for lmi_hinf_forward.1']
    %9 = vsyncpa [#allocation4], 0
    // Predicated region
    $region2: #{lmi_hinf_forward.1} parent=1 // pred_check
      _
    $region3: #{lmi_hinf_forward.1} parent=1 // pred_check_branch
      %11 = sbr.rel (0) target = $region5
    $region4: #{lmi_hinf_forward.1} parent=1 // pred_region
      _
    $region5: #{lmi_hinf_forward.1} parent=1 // pred_fallthru
      _
    // Predicated region
    $region6: #{lmi_hinf_forward.1} parent=1 // pred_check
      _
    $region7: #{lmi_hinf_forward.1} parent=1 // pred_check_branch
      %13 = sbr.rel (0) target = $region9
    $region8: #{lmi_hinf_forward.1} parent=1 // pred_region
      _
    $region9: #{lmi_hinf_forward.1} parent=1 // pred_fallthru
      _
    // Predicated region
    $region10: #{lmi_hinf_forward.1} parent=1 // pred_check
      _
    $region11: #{lmi_hinf_forward.1} parent=1 // pred_check_branch
      %15 = sbr.rel (0) target = $region13
    $region12: #{lmi_hinf_forward.1} parent=1 // pred_region
      _
    $region13: #{lmi_hinf_forward.1} parent=1 // pred_fallthru
      _
    %s16 = sld [smem:[#allocation2]]
    %v17 = vstv %s16
    %v18 = vrcp.pop %v17
    %s19 = vtos %v18
    %v20 = vld [vmem:[%s0] sm:$0xff]
    %v21 = vld [vmem:[%s0 + $0x8] sm:$0xff]
    %v22 = vld [vmem:[%s0 + $0x10] sm:$0xf]
    %v23 = vld [vmem:[%s1] sm:$0xff]
    %24 = vxpose.xlu0.b32.start [1/16] %v23, 128
    %25 = vxpose.xlu0.b32.cont [2/16] 0.0, 128
    %26 = vxpose.xlu0.b32.cont [3/16] 0.0, 128
    %27 = vxpose.xlu0.b32.cont [4/16] 0.0, 128
    %28 = vxpose.xlu0.b32.cont [5/16] 0.0, 128
    %29 = vxpose.xlu0.b32.cont [6/16] 0.0, 128
    %30 = vxpose.xlu0.b32.cont [7/16] 0.0, 128
    %31 = vxpose.xlu0.b32.cont [8/16] 0.0, 128
    %32 = vxpose.xlu0.b32.cont [9/16] 0.0, 128
    %33 = vxpose.xlu0.b32.cont [10/16] 0.0, 128
    %34 = vxpose.xlu0.b32.cont [11/16] 0.0, 128
    %35 = vxpose.xlu0.b32.cont [12/16] 0.0, 128
    %36 = vxpose.xlu0.b32.cont [13/16] 0.0, 128
    %37 = vxpose.xlu0.b32.cont [14/16] 0.0, 128
    %38 = vxpose.xlu0.b32.cont [15/16] 0.0, 128
    %39 = vxpose.xlu0.b32.end [16/16] 0.0, 128
    %v40 = vpop.trf.xlu0
    %v41 = vpop.trf.xlu0
    %v42 = vpop.trf.xlu0
    %v43 = vpop.trf.xlu0
    %v44 = vpop.trf.xlu0
    %v45 = vpop.trf.xlu0
    %v46 = vpop.trf.xlu0
    %v47 = vpop.trf.xlu0
    %v48 = vpop.trf.xlu0
    %v49 = vpop.trf.xlu0
    %v50 = vpop.trf.xlu0
    %v51 = vpop.trf.xlu0
    %v52 = vpop.trf.xlu0
    %v53 = vpop.trf.xlu0
    %v54 = vpop.trf.xlu0
    %v55 = vpop.trf.xlu0
    %v56 = vadd.f32 %v23, %v40
    %v57 = vmul.f32 %v56, 0.5
    %v58 = vsub.f32 0.0, %v57
    %59 = vxpose.xlu0.b32.start [1/16] %v20, 128
    %60 = vxpose.xlu0.b32.cont [2/16] 0.0, 128
    %61 = vxpose.xlu0.b32.cont [3/16] 0.0, 128
    %62 = vxpose.xlu0.b32.cont [4/16] 0.0, 128
    %63 = vxpose.xlu0.b32.cont [5/16] 0.0, 128
    %64 = vxpose.xlu0.b32.cont [6/16] 0.0, 128
    %65 = vxpose.xlu0.b32.cont [7/16] 0.0, 128
    %66 = vxpose.xlu0.b32.cont [8/16] 0.0, 128
    %67 = vxpose.xlu0.b32.cont [9/16] 0.0, 128
    %68 = vxpose.xlu0.b32.cont [10/16] 0.0, 128
    %69 = vxpose.xlu0.b32.cont [11/16] 0.0, 128
    %70 = vxpose.xlu0.b32.cont [12/16] 0.0, 128
    %71 = vxpose.xlu0.b32.cont [13/16] 0.0, 128
    %72 = vxpose.xlu0.b32.cont [14/16] 0.0, 128
    %73 = vxpose.xlu0.b32.cont [15/16] 0.0, 128
    %74 = vxpose.xlu0.b32.end [16/16] 0.0, 128
    %v75 = vpop.trf.xlu0
    %v76 = vpop.trf.xlu0
    %v77 = vpop.trf.xlu0
    %v78 = vpop.trf.xlu0
    %v79 = vpop.trf.xlu0
    %v80 = vpop.trf.xlu0
    %v81 = vpop.trf.xlu0
    %v82 = vpop.trf.xlu0
    %v83 = vpop.trf.xlu0
    %v84 = vpop.trf.xlu0
    %v85 = vpop.trf.xlu0
    %v86 = vpop.trf.xlu0
    %v87 = vpop.trf.xlu0
    %v88 = vpop.trf.xlu0
    %v89 = vpop.trf.xlu0
    %v90 = vpop.trf.xlu0
    %vm91 = vcmask 64512
    %v93 = vsel %vm91, %v75, 0
    %95 = vmatprep.subr.mxu0 0.0
    %96 = vmatpush1.msra.mxu0 %v57
    %97 = vmatprep.subr.mxu0 0.0
    %98 = vmatpush1.msra.mxu0 0.0
    %99 = vmatprep.subr.mxu0 0.0
    %100 = vmatpush1.msra.mxu0 0.0
    %101 = vmatprep.subr.mxu0 0.0
    %102 = vmatpush1.msra.mxu0 0.0
    %103 = vmatprep.subr.mxu0 0.0
    %104 = vmatpush1.msra.mxu0 0.0
    %105 = vmatprep.subr.mxu0 0.0
    %106 = vmatpush1.msra.mxu0 0.0
    %107 = vmatprep.subr.mxu0 0.0
    %108 = vmatpush1.msra.mxu0 0.0
    %109 = vmatprep.subr.mxu0 0.0
    %110 = vmatpush1.msra.mxu0 0.0
    %111 = vmatprep.subr.mxu0 0.0
    %112 = vmatpush1.msra.mxu0 0.0
    %113 = vmatprep.subr.mxu0 0.0
    %114 = vmatpush1.msra.mxu0 0.0
    %115 = vmatprep.subr.mxu0 0.0
    %116 = vmatpush1.msra.mxu0 0.0
    %117 = vmatprep.subr.mxu0 0.0
    %118 = vmatpush1.msra.mxu0 0.0
    %119 = vmatprep.subr.mxu0 0.0
    %120 = vmatpush1.msra.mxu0 0.0
    %121 = vmatprep.subr.mxu0 0.0
    %122 = vmatpush1.msra.mxu0 0.0
    %123 = vmatprep.subr.mxu0 0.0
    %124 = vmatpush1.msra.mxu0 0.0
    %125 = vmatprep.subr.mxu0 0.0
    %126 = vmatpush1.msra.mxu0 0.0
    %127 = vmatprep.subr.mxu0 0.0
    %128 = vmatpush1.msra.mxu0 0.0
    %129 = vmatprep.subr.mxu0 0.0
    %130 = vmatpush1.msra.mxu0 0.0
    %131 = vmatprep.subr.mxu0 0.0
    %132 = vmatpush1.msra.mxu0 0.0
    %133 = vmatprep.subr.mxu0 0.0
    %134 = vmatpush1.msra.mxu0 0.0
    %135 = vmatprep.subr.mxu0 0.0
    %136 = vmatpush1.msra.mxu0 0.0
    %137 = vmatprep.subr.mxu0 0.0
    %138 = vmatpush1.msra.mxu0 0.0
    %139 = vmatprep.subr.mxu0 0.0
    %140 = vmatpush1.msra.mxu0 0.0
    %141 = vmatprep.subr.mxu0 0.0
    %142 = vmatpush1.msra.mxu0 0.0
    %143 = vmatprep.subr.mxu0 0.0
    %144 = vmatpush1.msra.mxu0 0.0
    %145 = vmatprep.subr.mxu0 0.0
    %146 = vmatpush1.msra.mxu0 0.0
    %147 = vmatprep.subr.mxu0 0.0
    %148 = vmatpush1.msra.mxu0 0.0
    %149 = vmatprep.subr.mxu0 0.0
    %150 = vmatpush1.msra.mxu0 0.0
    %151 = vmatprep.subr.mxu0 0.0
    %152 = vmatpush1.msra.mxu0 0.0
    %153 = vmatprep.subr.mxu0 0.0
    %154 = vmatpush1.msra.mxu0 0.0
    %155 = vmatprep.subr.mxu0 0.0
    %156 = vmatpush1.msra.mxu0 0.0
    %157 = vmatprep.subr.mxu0 0.0
    %158 = vmatpush1.msra.mxu0 0.0
    %159 = vmatprep.mubr.f32.mxu0 0.0
    %160 = vmatmul.mubr.f32.gmra.mrb[0].mxu0 %v93
    %v161 = vpop.f32.mrb[0].mxu0
    %v162 = vadd.f32 0.0, %v161
    %v163 = vpop.f32.mrb[0].mxu0
    %164 = vdwg.mxu0
    %165 = vxpose.xlu0.b32.start [1/16] %v162, 128
    %166 = vxpose.xlu0.b32.cont [2/16] 0.0, 128
    %167 = vxpose.xlu0.b32.cont [3/16] 0.0, 128
    %168 = vxpose.xlu0.b32.cont [4/16] 0.0, 128
    %169 = vxpose.xlu0.b32.cont [5/16] 0.0, 128
    %170 = vxpose.xlu0.b32.cont [6/16] 0.0, 128
    %171 = vxpose.xlu0.b32.cont [7/16] 0.0, 128
    %172 = vxpose.xlu0.b32.cont [8/16] 0.0, 128
    %173 = vxpose.xlu0.b32.cont [9/16] 0.0, 128
    %174 = vxpose.xlu0.b32.cont [10/16] 0.0, 128
    %175 = vxpose.xlu0.b32.cont [11/16] 0.0, 128
    %176 = vxpose.xlu0.b32.cont [12/16] 0.0, 128
    %177 = vxpose.xlu0.b32.cont [13/16] 0.0, 128
    %178 = vxpose.xlu0.b32.cont [14/16] 0.0, 128
    %179 = vxpose.xlu0.b32.cont [15/16] 0.0, 128
    %180 = vxpose.xlu0.b32.end [16/16] 0.0, 128
    %v181 = vpop.trf.xlu0
    %v182 = vpop.trf.xlu0
    %v183 = vpop.trf.xlu0
    %v184 = vpop.trf.xlu0
    %v185 = vpop.trf.xlu0
    %v186 = vpop.trf.xlu0
    %v187 = vpop.trf.xlu0
    %v188 = vpop.trf.xlu0
    %v189 = vpop.trf.xlu0
    %v190 = vpop.trf.xlu0
    %v191 = vpop.trf.xlu0
    %v192 = vpop.trf.xlu0
    %v193 = vpop.trf.xlu0
    %v194 = vpop.trf.xlu0
    %v195 = vpop.trf.xlu0
    %v196 = vpop.trf.xlu0
    %v197 = vadd.f32 %v162, %v181
    %v198 = vsub.f32 0.0, %v197
    %v199 = vstv %s19
    %v200 = vmul.f32 %v199, %v21
    %v201 = vsub.f32 %v198, %v200
    %v203 = vsel %vm91, %v22, 0
    %205 = vmatprep.subr.mxu0 0.0
    %206 = vmatpush1.msra.mxu0 %v58
    %207 = vmatprep.subr.mxu0 0.0
    %208 = vmatpush1.msra.mxu0 0.0
    %209 = vmatprep.subr.mxu0 0.0
    %210 = vmatpush1.msra.mxu0 0.0
    %211 = vmatprep.subr.mxu0 0.0
    %212 = vmatpush1.msra.mxu0 0.0
    %213 = vmatprep.subr.mxu0 0.0
    %214 = vmatpush1.msra.mxu0 0.0
    %215 = vmatprep.subr.mxu0 0.0
    %216 = vmatpush1.msra.mxu0 0.0
    %217 = vmatprep.subr.mxu0 0.0
    %218 = vmatpush1.msra.mxu0 0.0
    %219 = vmatprep.subr.mxu0 0.0
    %220 = vmatpush1.msra.mxu0 0.0
    %221 = vmatprep.subr.mxu0 0.0
    %222 = vmatpush1.msra.mxu0 0.0
    %223 = vmatprep.subr.mxu0 0.0
    %224 = vmatpush1.msra.mxu0 0.0
    %225 = vmatprep.subr.mxu0 0.0
    %226 = vmatpush1.msra.mxu0 0.0
    %227 = vmatprep.subr.mxu0 0.0
    %228 = vmatpush1.msra.mxu0 0.0
    %229 = vmatprep.subr.mxu0 0.0
    %230 = vmatpush1.msra.mxu0 0.0
    %231 = vmatprep.subr.mxu0 0.0
    %232 = vmatpush1.msra.mxu0 0.0
    %233 = vmatprep.subr.mxu0 0.0
    %234 = vmatpush1.msra.mxu0 0.0
    %235 = vmatprep.subr.mxu0 0.0
    %236 = vmatpush1.msra.mxu0 0.0
    %237 = vmatprep.subr.mxu0 0.0
    %238 = vmatpush1.msra.mxu0 0.0
    %239 = vmatprep.subr.mxu0 0.0
    %240 = vmatpush1.msra.mxu0 0.0
    %241 = vmatprep.subr.mxu0 0.0
    %242 = vmatpush1.msra.mxu0 0.0
    %243 = vmatprep.subr.mxu0 0.0
    %244 = vmatpush1.msra.mxu0 0.0
    %245 = vmatprep.subr.mxu0 0.0
    %246 = vmatpush1.msra.mxu0 0.0
    %247 = vmatprep.subr.mxu0 0.0
    %248 = vmatpush1.msra.mxu0 0.0
    %249 = vmatprep.subr.mxu0 0.0
    %250 = vmatpush1.msra.mxu0 0.0
    %251 = vmatprep.subr.mxu0 0.0
    %252 = vmatpush1.msra.mxu0 0.0
    %253 = vmatprep.subr.mxu0 0.0
    %254 = vmatpush1.msra.mxu0 0.0
    %255 = vmatprep.subr.mxu0 0.0
    %256 = vmatpush1.msra.mxu0 0.0
    %257 = vmatprep.subr.mxu0 0.0
    %258 = vmatpush1.msra.mxu0 0.0
    %259 = vmatprep.subr.mxu0 0.0
    %260 = vmatpush1.msra.mxu0 0.0
    %261 = vmatprep.subr.mxu0 0.0
    %262 = vmatpush1.msra.mxu0 0.0
    %263 = vmatprep.subr.mxu0 0.0
    %264 = vmatpush1.msra.mxu0 0.0
    %265 = vmatprep.subr.mxu0 0.0
    %266 = vmatpush1.msra.mxu0 0.0
    %267 = vmatprep.subr.mxu0 0.0
    %268 = vmatpush1.msra.mxu0 0.0
    %269 = vmatprep.mubr.f32.mxu0 0.0
    %270 = vmatmul.mubr.f32.gmra.mrb[0].mxu0 %v203
    %v271 = vpop.f32.mrb[0].mxu0
    %v272 = vadd.f32 0.0, %v271
    %v273 = vpop.f32.mrb[0].mxu0
    %274 = vdwg.mxu0
    %275 = vxpose.xlu0.b32.start [1/16] %v272, 128
    %276 = vxpose.xlu0.b32.cont [2/16] 0.0, 128
    %277 = vxpose.xlu0.b32.cont [3/16] 0.0, 128
    %278 = vxpose.xlu0.b32.cont [4/16] 0.0, 128
    %279 = vxpose.xlu0.b32.cont [5/16] 0.0, 128
    %280 = vxpose.xlu0.b32.cont [6/16] 0.0, 128
    %281 = vxpose.xlu0.b32.cont [7/16] 0.0, 128
    %282 = vxpose.xlu0.b32.cont [8/16] 0.0, 128
    %283 = vxpose.xlu0.b32.cont [9/16] 0.0, 128
    %284 = vxpose.xlu0.b32.cont [10/16] 0.0, 128
    %285 = vxpose.xlu0.b32.cont [11/16] 0.0, 128
    %286 = vxpose.xlu0.b32.cont [12/16] 0.0, 128
    %287 = vxpose.xlu0.b32.cont [13/16] 0.0, 128
    %288 = vxpose.xlu0.b32.cont [14/16] 0.0, 128
    %289 = vxpose.xlu0.b32.cont [15/16] 0.0, 128
    %290 = vxpose.xlu0.b32.end [16/16] 0.0, 128
    %v291 = vpop.trf.xlu0
    %v292 = vpop.trf.xlu0
    %v293 = vpop.trf.xlu0
    %v294 = vpop.trf.xlu0
    %v295 = vpop.trf.xlu0
    %v296 = vpop.trf.xlu0
    %v297 = vpop.trf.xlu0
    %v298 = vpop.trf.xlu0
    %v299 = vpop.trf.xlu0
    %v300 = vpop.trf.xlu0
    %v301 = vpop.trf.xlu0
    %v302 = vpop.trf.xlu0
    %v303 = vpop.trf.xlu0
    %v304 = vpop.trf.xlu0
    %v305 = vpop.trf.xlu0
    %v306 = vpop.trf.xlu0
    %v307 = vlaneseq
    %v308 = vshrl.u32 %v307, 7
    %v309 = vlaneseq
    %v310 = vand.u32 %v309, 127
    %vm311 = vcmp.eq.s32.totalorder %v308, %v310
    %v312 = vstv %s16
    %v313 = vsel %vm311, %v312, 0.0
    %315 = vrot.lane.b32.xlu0 %v291, 8
    %v316 = vpop.permute.xlu0 %315
    %v318 = vsel %vm91, %v201, %v316
    %vm319 = vcmask 97280
    %320 = vst.msk [vmem:[#allocation3] sm:$0xff] %vm319, %v318
    %322 = vrot.lane.b32.xlu0 %v313, 8
    %v323 = vpop.permute.xlu0 %322
    %v325 = vsel %vm91, %v272, %v323
    %vm326 = vcmask 93184
    %327 = vst.msk [vmem:[#allocation3 + $0x8] sm:$0xf] %vm326, %v325
    // Predicated region
    $region14: #{lmi_hinf_forward.1} parent=1 // pred_check
      _
    $region15: #{lmi_hinf_forward.1} parent=1 // pred_check_branch
      %329 = sbr.rel (0) target = $region17
    $region16: #{lmi_hinf_forward.1} parent=1 // pred_region
      %s331 = ssub.s32 256, 256
      %332 = vsyncadd [#allocation4], %s331
      %s333 = sshll.u32 [#allocation3], 4
      %s334 = int_to_ptr.vmem [resolvable:$true] %s333
      %339 = dma.vmem_to_hbm [thread:$0]  %s334, 256, %s3, [#allocation4], 128, 128, 8
    $region17: #{lmi_hinf_forward.1} parent=1 // pred_fallthru
      _
    // Predicated region
    $region18: #{lmi_hinf_forward.1} parent=1 // pred_check
      _
    $region19: #{lmi_hinf_forward.1} parent=1 // pred_check_branch
      %341 = sbr.rel (0) target = $region21
    $region20: #{lmi_hinf_forward.1} parent=1 // pred_region
      %342 = dma.done [#allocation4], 256
    $region21: #{lmi_hinf_forward.1} parent=1 // pred_fallthru
      _
    %343 = vsyncpa [#allocation4], 1

</llo_original>
